<compile_context>
chip_gen: v7x
topology: tpu7x:2x2x1
jax: 0.10.0
libtpu: 0.0.40
codegen_flags: <defaults>
</compile_context>

<pallas_src>
import functools

import jax
import jax.numpy as jnp
from jax.experimental import pallas as pl
from jax.experimental.pallas import tpu as pltpu


def _round_up(x, m):
    return (x + m - 1) // m * m


def _rbm_fwd_kernel(x_ref, wt_ref, b_ref, o_ref, acc_ref):
    """One (tm, tn) output tile; K is the innermost ("arbitrary") grid axis.

    x_ref  : (tm, tk)       activation tile (cast to the operand dtype here)
    wt_ref : (tk, tn)       pre-transposed weight tile ((In, Out) layout)
    b_ref  : (1,  tn)       bias tile (f32)
    o_ref  : (tm, tn)       output tile (tn multiple of 128 -> lane-dense vst)
    acc_ref: (tm, tn) f32   VMEM accumulator, resident across the K sweep
    """
    k = pl.program_id(2)

    # In-kernel operand cast (no wrapper-side astype pass over x in HBM).
    prod = jnp.dot(x_ref[...].astype(wt_ref.dtype), wt_ref[...],
                   preferred_element_type=jnp.float32)

    @pl.when(k == 0)
    def _first():
        acc_ref[...] = prod          # direct write: no zero-init store

    @pl.when(k > 0)
    def _accum():
        acc_ref[...] += prod

    @pl.when(k == pl.num_programs(2) - 1)
    def _epilogue():
        # Bias add + sigmoid once per output tile.  sigmoid(z) written as
        # 0.5*tanh(0.5*z)+0.5 -> a single EUP transcendental per element.
        z = acc_ref[...] + b_ref[...]
        o_ref[...] = (0.5 * jnp.tanh(0.5 * z) + 0.5).astype(o_ref.dtype)


def prepare_rbm_params(weight, bias, *, param_dtype=jnp.bfloat16):
    """One-time layout prep (do at parameter-load time, NOT per forward call).

    weight: (out_features, in_features) -> wt: (In_p, Out_p) with Out padded
    to a multiple of 256 lanes (matches the v6e/v7x MXU width, lane-dense
    output) and In padded to a multiple of 1024 only when it will be K-tiled.
    bias -> (1, Out_p) float32.  param_dtype defaults to bf16 (f32 MXU
    accumulation; halves weight HBM traffic); pass jnp.float32 for exact math.
    """
    out_f, in_f = weight.shape
    out_p = _round_up(out_f, 256)
    in_p = in_f if in_f <= 1024 else _round_up(in_f, 1024)
    w = jnp.pad(weight, ((0, out_p - out_f), (0, in_p - in_f)))
    wt = jnp.transpose(w).astype(param_dtype)              # (In_p, Out_p)
    b2 = jnp.pad(bias, (0, out_p - out_f)).reshape(1, out_p).astype(jnp.float32)
    return wt, b2


@functools.partial(jax.jit, static_argnames=("out_features",))
def rbm_forward(x, wt, b2, out_features):
    """sigmoid(x @ W.T + b) where (wt, b2) = prepare_rbm_params(W, b)."""
    B, in_f = x.shape
    in_p, out_p = wt.shape
    out_dtype = x.dtype
    x_bytes = jnp.dtype(x.dtype).itemsize
    op_bytes = jnp.dtype(wt.dtype).itemsize
    out_bytes = jnp.dtype(out_dtype).itemsize

    # ---- Tile selection (static) -------------------------------------------
    # tm: minimize M padding; up to 512 rows per tile.
    if B <= 512:
        tm = _round_up(B, 8)
    else:
        tm, best_pad = 512, None
        for cand in (512, 256, 128):
            pad = _round_up(B, cand) - B
            if best_pad is None or pad < best_pad:
                tm, best_pad = cand, pad
    m_p = _round_up(B, tm)

    # tn: out_p is a multiple of 256; prefer 512-wide tiles when they divide.
    tn = 512 if (out_p % 512 == 0) else 256
    # tk: cap at 1024 (in_p was padded to a multiple of 1024 when > 1024).
    tk = in_p if in_p <= 1024 else 1024

    # Guarantee >= 2 parallel (M, N) tiles so both v7x TensorCores get work
    # (the K axis is "arbitrary" and cannot be sharded).  Harmless elsewhere.
    if (m_p // tm) * (out_p // tn) < 2 and tn > 128:
        tn //= 2

    grid_m, grid_n, grid_k = m_p // tm, out_p // tn, in_p // tk
    grid = (grid_m, grid_n, grid_k)

    # Pad x only when its shape actually requires it (zero rows/cols are exact).
    if (m_p, in_p) != (B, in_f):
        x = jnp.pad(x, ((0, m_p - B), (0, in_p - in_f)))

    # Double-buffered inputs + outputs + accumulator, plus headroom; cap at
    # 48 MiB to leave room for Mosaic scratch under v7x's 64 MiB physical VMEM.
    vmem_bytes = (2 * tm * tk * x_bytes
                  + 2 * tk * tn * op_bytes
                  + 2 * tn * 4
                  + 2 * tm * tn * out_bytes
                  + tm * tn * 4
                  + (4 << 20))
    vmem_bytes = int(min(max(vmem_bytes, 16 << 20), 48 << 20))

    # Truthful re-streaming estimate: wt read grid_m times, x read grid_n times.
    cost = pl.CostEstimate(
        flops=2 * B * in_f * out_features,
        transcendentals=B * out_features,
        bytes_accessed=(x.size * x_bytes * grid_n
                        + wt.size * op_bytes * grid_m
                        + b2.size * 4 * grid_m
                        + m_p * out_p * out_bytes),
    )

    out = pl.pallas_call(
        _rbm_fwd_kernel,
        out_shape=jax.ShapeDtypeStruct((m_p, out_p), out_dtype),
        grid_spec=pltpu.PrefetchScalarGridSpec(
            num_scalar_prefetch=0,
            grid=grid,
            in_specs=[
                pl.BlockSpec((tm, tk), lambda i, j, k: (i, k)),
                pl.BlockSpec((tk, tn), lambda i, j, k: (k, j)),
                pl.BlockSpec((1, tn), lambda i, j, k: (0, j)),
            ],
            out_specs=pl.BlockSpec((tm, tn), lambda i, j, k: (i, j)),
            scratch_shapes=[pltpu.VMEM((tm, tn), jnp.float32)],
        ),
        compiler_params=pltpu.CompilerParams(
            dimension_semantics=("parallel", "parallel", "arbitrary"),
            vmem_limit_bytes=vmem_bytes,
        ),
        cost_estimate=cost,
    )(x, wt, b2)

    # Strip lane / row padding.  (Downstream consumers could instead keep the
    # padded layout and avoid this extra HBM copy.)
    return out[:B, :out_features]


if __name__ == "__main__":
    key = jax.random.PRNGKey(0)
    k_w, k_x, k_w2, k_b2, k_x2 = jax.random.split(key, 5)

    # --- small shape consistent with the module (in=64, out=32, batch=8) ----
    in_features, out_features, batch = 64, 32, 8
    weight = jax.random.normal(k_w, (out_features, in_features),
                               dtype=jnp.float32) * 0.1
    bias = jnp.zeros((out_features,), dtype=jnp.float32)
    x = jax.random.normal(k_x, (batch, in_features), dtype=jnp.float32)

    # f32 weight storage -> tight numerical check against the reference.
    wt, b2 = prepare_rbm_params(weight, bias, param_dtype=jnp.float32)
    out = jax.block_until_ready(rbm_forward(x, wt, b2, out_features))
    ref = jax.nn.sigmoid(x @ weight.T + bias)
    assert out.shape == (batch, out_features)
    assert jnp.allclose(out, ref, atol=1e-5, rtol=1e-5)

    # --- larger shape exercising the tiled (parallel, parallel, K) grid -----
    B2, IN2, OUT2 = 256, 1024, 384
    w_big = jax.random.normal(k_w2, (OUT2, IN2), dtype=jnp.float32) * 0.05
    b_big = jax.random.normal(k_b2, (OUT2,), dtype=jnp.float32) * 0.1
    x_big = jax.random.normal(k_x2, (B2, IN2), dtype=jnp.float32)
    ref_big = jax.nn.sigmoid(x_big @ w_big.T + b_big)

    wt_big, b2_big = prepare_rbm_params(w_big, b_big, param_dtype=jnp.float32)
    out_big = jax.block_until_ready(rbm_forward(x_big, wt_big, b2_big, OUT2))
    assert out_big.shape == (B2, OUT2)
    assert jnp.allclose(out_big, ref_big, atol=1e-3, rtol=1e-3)

    # --- default (bf16) weight storage: f32 MXU accumulation + f32 epilogue -
    wt_bf, b2_bf = prepare_rbm_params(w_big, b_big)
    out_bf = jax.block_until_ready(rbm_forward(x_big, wt_bf, b2_bf, OUT2))
    assert jnp.allclose(out_bf, ref_big, atol=3e-2, rtol=3e-2)

    print("KERNEL_OK")
</pallas_src>

<mosaic_0001>
module attributes {stable_mosaic.version = 11 : i64} {
  func.func @_rbm_fwd_kernel(%arg0: i32, %arg1: i32, %arg2: i32, %arg3: memref<8x64xf32, #tpu.memory_space<vmem>>, %arg4: memref<64x128xf32, #tpu.memory_space<vmem>>, %arg5: memref<1x128xf32, #tpu.memory_space<vmem>>, %arg6: memref<8x128xf32, #tpu.memory_space<vmem>>, %arg7: memref<8x128xf32, #tpu.memory_space<vmem>>) attributes {dimension_semantics = [#tpu.dimension_semantics<parallel>, #tpu.dimension_semantics<parallel>, #tpu.dimension_semantics<arbitrary>], iteration_bounds = array<i64: 1, 2, 1>, scalar_prefetch = 0 : i64, scratch_operands = 1 : i64, tpu.core_type = #tpu.core_type<tc>, window_params = [{transform_indices = @transform_0, window_bounds = array<i64: 8, 64>}, {transform_indices = @transform_1, window_bounds = array<i64: 64, 128>}, {transform_indices = @transform_2, window_bounds = array<i64: 1, 128>}, {transform_indices = @transform_3, window_bounds = array<i64: 8, 128>}]} {
    %c0 = arith.constant 0 : index
    %c0_0 = arith.constant 0 : index
    %0 = vector.load %arg3[%c0, %c0_0] : memref<8x64xf32, #tpu.memory_space<vmem>>, vector<8x64xf32>
    %c0_1 = arith.constant 0 : index
    %c0_2 = arith.constant 0 : index
    %1 = vector.load %arg4[%c0_1, %c0_2] : memref<64x128xf32, #tpu.memory_space<vmem>>, vector<64x128xf32>
    %cst = arith.constant dense<0.000000e+00> : vector<8x128xf32>
    %2 = tpu.matmul %0, %1, %cst {dimension_numbers = #tpu.dot_dimension_numbers<[1], [0], [0], [1], [0, 0, 1, 1], [], []>} : vector<8x64xf32>, vector<64x128xf32>, vector<8x128xf32> -> vector<8x128xf32>
    %c0_i32 = arith.constant 0 : i32
    %3 = arith.cmpi eq, %arg2, %c0_i32 : i32
    %4 = arith.extui %3 : i1 to i32
    %c0_i32_3 = arith.constant 0 : i32
    %5 = arith.cmpi ne, %4, %c0_i32_3 : i32
    scf.if %5 {
      %c0_8 = arith.constant 0 : index
      %c0_9 = arith.constant 0 : index
      %12 = vector.load %arg7[%c0_8, %c0_9] : memref<8x128xf32, #tpu.memory_space<vmem>>, vector<8x128xf32>
      tpu.vector_store %arg7[%c0_8, %c0_9], %2 {strides = array<i32>} : memref<8x128xf32, #tpu.memory_space<vmem>>, vector<8x128xf32>,
    } else {
    }
    %c0_i32_4 = arith.constant 0 : i32
    %6 = arith.cmpi sgt, %arg2, %c0_i32_4 : i32
    %7 = arith.extui %6 : i1 to i32
    %c0_i32_5 = arith.constant 0 : i32
    %8 = arith.cmpi ne, %7, %c0_i32_5 : i32
    scf.if %8 {
      %c0_8 = arith.constant 0 : index
      %c0_9 = arith.constant 0 : index
      %12 = vector.load %arg7[%c0_8, %c0_9] : memref<8x128xf32, #tpu.memory_space<vmem>>, vector<8x128xf32>
      %13 = arith.addf %12, %2 : vector<8x128xf32>
      %c0_10 = arith.constant 0 : index
      %c0_11 = arith.constant 0 : index
      %14 = vector.load %arg7[%c0_10, %c0_11] : memref<8x128xf32, #tpu.memory_space<vmem>>, vector<8x128xf32>
      tpu.vector_store %arg7[%c0_10, %c0_11], %13 {strides = array<i32>} : memref<8x128xf32, #tpu.memory_space<vmem>>, vector<8x128xf32>,
    } else {
    }
    %c0_i32_6 = arith.constant 0 : i32
    %9 = arith.cmpi eq, %arg2, %c0_i32_6 : i32
    %10 = arith.extui %9 : i1 to i32
    %c0_i32_7 = arith.constant 0 : i32
    %11 = arith.cmpi ne, %10, %c0_i32_7 : i32
    scf.if %11 {
      %c0_8 = arith.constant 0 : index
      %c0_9 = arith.constant 0 : index
      %12 = vector.load %arg7[%c0_8, %c0_9] : memref<8x128xf32, #tpu.memory_space<vmem>>, vector<8x128xf32>
      %c0_10 = arith.constant 0 : index
      %c0_11 = arith.constant 0 : index
      %13 = vector.load %arg5[%c0_10, %c0_11] : memref<1x128xf32, #tpu.memory_space<vmem>>, vector<1x128xf32>
      %14 = vector.broadcast %13 : vector<1x128xf32> to vector<8x128xf32>
      %15 = arith.addf %12, %14 : vector<8x128xf32>
      %cst_12 = arith.constant 5.000000e-01 : f32
      %16 = vector.broadcast %cst_12 : f32 to vector<8x128xf32>
      %17 = arith.mulf %16, %15 : vector<8x128xf32>
      %18 = math.tanh %17 : vector<8x128xf32>
      %cst_13 = arith.constant 5.000000e-01 : f32
      %19 = vector.broadcast %cst_13 : f32 to vector<8x128xf32>
      %20 = arith.mulf %19, %18 : vector<8x128xf32>
      %cst_14 = arith.constant 5.000000e-01 : f32
      %21 = vector.broadcast %cst_14 : f32 to vector<8x128xf32>
      %22 = arith.addf %20, %21 : vector<8x128xf32>
      %c0_15 = arith.constant 0 : index
      %c0_16 = arith.constant 0 : index
      %23 = vector.load %arg6[%c0_15, %c0_16] : memref<8x128xf32, #tpu.memory_space<vmem>>, vector<8x128xf32>
      tpu.vector_store %arg6[%c0_15, %c0_16], %22 {strides = array<i32>} : memref<8x128xf32, #tpu.memory_space<vmem>>, vector<8x128xf32>,
    } else {
    }
    return
  }
  func.func @transform_0(%arg0: i32, %arg1: i32, %arg2: i32) -> (i32, i32) {
    %c0_i32 = arith.constant 0 : i32
    return %arg0, %arg2 : i32, i32
  }
  func.func @transform_1(%arg0: i32, %arg1: i32, %arg2: i32) -> (i32, i32) {
    %c0_i32 = arith.constant 0 : i32
    return %arg2, %arg1 : i32, i32
  }
  func.func @transform_2(%arg0: i32, %arg1: i32, %arg2: i32) -> (i32, i32) {
    %c0_i32 = arith.constant 0 : i32
    %c0_i32_0 = arith.constant 0 : i32
    return %c0_i32, %arg1 : i32, i32
  }
  func.func @transform_3(%arg0: i32, %arg1: i32, %arg2: i32) -> (i32, i32) {
    %c0_i32 = arith.constant 0 : i32
    return %arg0, %arg1 : i32, i32
  }
}

</mosaic_0001>

<llo_original>
// kernel: rbm_forward.1
$region0: #{rbm_forward.1}
  #allocation0 [shape = 'u32[]', space=smem, size = 0x4, offset = 0x4, fixed_abs, tag = 'smem constant byte address 0x4 - core index']
  #allocation1 [shape = 'u32[144,128]{1,0:T(1,128)}', space=vmem, size = 0x12000, scoped, tag = 'internal scratch']
  #allocation2 [shape = 'f32[8,128]{1,0:T(8,128)}', space=vmem, size = 0x1000, scoped, tag = 'scratch operand']
  %s0 = inlined_call_operand.hbm [shape: f32[8,64], index: 0, kind: input, shape index: {}]
  %s1 = inlined_call_operand.hbm [shape: f32[64,256], index: 1, kind: input, shape index: {}]
  %s2 = inlined_call_operand.vmem [shape: f32[1,256], index: 2, kind: input, shape index: {}]
  %s3 = inlined_call_operand.vmem [shape: f32[8,256], index: 3, kind: output, shape index: {}]
  %s4 = sld [smem:[#allocation0]]
  $region65: #{rbm_forward.1} parent=0
    _
  %s6 = ssub.s32 1, %s4
  %s7 = scalar_select 0, %s6, %s4
  $region1: #{rbm_forward.1} parent=0
    #allocation3 [shape = 'u8[4096]{0}', space=vmem, size = 0x1000, scoped, tag = 'input window, operand 0, single buffered']
    #allocation4 [shape = 's32[2]{0}', space=sflag, size = 0x8, scoped, tag = 'scoped memory for rbm_forward.1']
    #allocation5 [shape = 'u8[65536]{0}', space=vmem, size = 0x10000, scoped, tag = 'input window, operand 1']
    #allocation6 [shape = 's32[2]{0}', space=sflag, size = 0x8, scoped, tag = 'scoped memory for rbm_forward.1']
    %8 = vsyncpa [#allocation4], 0
    %9 = vsyncpa [#allocation6], 0
    %s10 = scalar_lea.sflag [#allocation6], 1
    %11 = vsyncpa %s10, 0
    loop: start=0, step=1, limit=4
    $region2: #{rbm_forward.1} parent=1 // loop_pre_header
      _
    $region3: #{rbm_forward.1} parent=1 // loop_header
      %s13 = sphi 0, %s17
      %p14 = scmp.ge.s32.totalorder %s13, 4
      %s20 = sphi 0, %s39
      %s21 = sphi 0, %s35
      %s22 = sphi 0, %s31
      %s23 = sphi 0, %s20
      %s24 = sphi 0, %s21
      %s25 = sphi 0, %s22
      %s26 = sphi 0, %s23
      %s27 = sphi 0, %s24
      %s28 = sphi 0, %s25
      %s44 = sphi 0, %s46
      %s47 = sphi 0, %s44
      %s48 = sphi 0, %s47
      %s64 = sphi 0, %s48
      %s72 = sphi 0, %s74
      %s75 = sphi 0, %s72
      %s76 = sphi 0, %s75
      %s92 = sphi 0, %s76
      %s98 = sphi 0, %s100
      %s101 = sphi 0, %s98
      %s102 = sphi 0, %s101
      %s118 = sphi 0, %s102
      %s126 = sphi 0, %s128
      %s129 = sphi 0, %s126
      %s130 = sphi 0, %s129
      %s146 = sphi 0, %s130
    $region4: #{rbm_forward.1} parent=1 // loop_header_branch
      %16 = sbr.rel (%p14) target = $region8
    $region5: #{rbm_forward.1} parent=1 // loop_body
      %s18 = ssub.s32 %s13, 1
      %s19 = ssub.s32 %s13, 2
      %s29 = sadd.s32 1, %s22
      %p30 = scmp.ge.s32.totalorder %s29, 1
      %s31 = scalar_select %p30, 0, %s29
      %s32 = sadd.s32 1, %s21
      %s33 = scalar_select %p30, %s32, %s21
      %p34 = scmp.ge.s32.totalorder %s33, 2
      %s35 = scalar_select %p34, 0, %s33
      %s36 = sadd.s32 1, %s20
      %s37 = scalar_select %p34, %s36, %s20
      %p38 = scmp.ge.s32.totalorder %s37, 1
      %s39 = scalar_select %p38, 0, %s37
      %s40 = ssub.s32 %s20, %s39
      %s41 = ssub.s32 %s22, %s31
      %s42 = sor.u32 %s40, %s41
      %p43 = scmp.eq.s32.totalorder %s42, 0
      %s45 = sadd.s32 %s44, 1
      %s46 = scalar_select %p43, %s44, %s45
      %p49 = pneg %p43
      %p50 = scmp.eq.s32.totalorder %s13, 1
      %p51 = por %p49, %p50
      %p52 = scmp.ne.s32.totalorder %s44, %s47
      %p53 = scmp.eq.s32.totalorder %s13, 0
      %p54 = por %p52, %p53
      %p55 = scmp.ne.s32.totalorder %s44, %s47
      %p56 = scmp.eq.s32.totalorder %s18, 1
      %p57 = por %p55, %p56
      %p58 = scmp.ne.s32.totalorder %s47, %s48
      %p59 = scmp.eq.s32.totalorder %s18, 0
      %p60 = por %p58, %p59
      %p61 = scmp.ne.s32.totalorder %s47, %s48
      %p62 = scmp.eq.s32.totalorder %s19, 1
      %p63 = por %p61, %p62
      %p65 = scmp.ne.s32.totalorder %s48, %s64
      %p66 = scmp.eq.s32.totalorder %s19, 0
      %p67 = por %p65, %p66
      %s68 = ssub.s32 %s22, %s31
      %s69 = ssub.s32 %s21, %s35
      %s70 = sor.u32 %s68, %s69
      %p71 = scmp.eq.s32.totalorder %s70, 0
      %s73 = sadd.s32 %s72, 1
      %s74 = scalar_select %p71, %s72, %s73
      %p77 = pneg %p71
      %p78 = scmp.eq.s32.totalorder %s13, 1
      %p79 = por %p77, %p78
      %p80 = scmp.ne.s32.totalorder %s72, %s75
      %p81 = scmp.eq.s32.totalorder %s13, 0
      %p82 = por %p80, %p81
      %p83 = scmp.ne.s32.totalorder %s72, %s75
      %p84 = scmp.eq.s32.totalorder %s18, 1
      %p85 = por %p83, %p84
      %p86 = scmp.ne.s32.totalorder %s75, %s76
      %p87 = scmp.eq.s32.totalorder %s18, 0
      %p88 = por %p86, %p87
      %p89 = scmp.ne.s32.totalorder %s75, %s76
      %p90 = scmp.eq.s32.totalorder %s19, 1
      %p91 = por %p89, %p90
      %p93 = scmp.ne.s32.totalorder %s76, %s92
      %p94 = scmp.eq.s32.totalorder %s19, 0
      %p95 = por %p93, %p94
      %s96 = ssub.s32 %s21, %s35
      %p97 = scmp.eq.s32.totalorder %s96, 0
      %s99 = sadd.s32 %s98, 1
      %s100 = scalar_select %p97, %s98, %s99
      %p103 = pneg %p97
      %p104 = scmp.eq.s32.totalorder %s13, 1
      %p105 = por %p103, %p104
      %p106 = scmp.ne.s32.totalorder %s98, %s101
      %p107 = scmp.eq.s32.totalorder %s13, 0
      %p108 = por %p106, %p107
      %p109 = scmp.ne.s32.totalorder %s98, %s101
      %p110 = scmp.eq.s32.totalorder %s18, 1
      %p111 = por %p109, %p110
      %p112 = scmp.ne.s32.totalorder %s101, %s102
      %p113 = scmp.eq.s32.totalorder %s18, 0
      %p114 = por %p112, %p113
      %p115 = scmp.ne.s32.totalorder %s101, %s102
      %p116 = scmp.eq.s32.totalorder %s19, 1
      %p117 = por %p115, %p116
      %p119 = scmp.ne.s32.totalorder %s102, %s118
      %p120 = scmp.eq.s32.totalorder %s19, 0
      %p121 = por %p119, %p120
      %s122 = ssub.s32 %s20, %s39
      %s123 = ssub.s32 %s21, %s35
      %s124 = sor.u32 %s122, %s123
      %p125 = scmp.eq.s32.totalorder %s124, 0
      %s127 = sadd.s32 %s126, 1
      %s128 = scalar_select %p125, %s126, %s127
      %p131 = pneg %p125
      %p132 = scmp.eq.s32.totalorder %s13, 1
      %p133 = por %p131, %p132
      %p134 = scmp.ne.s32.totalorder %s126, %s129
      %p135 = scmp.eq.s32.totalorder %s13, 0
      %p136 = por %p134, %p135
      %p137 = scmp.ne.s32.totalorder %s126, %s129
      %p138 = scmp.eq.s32.totalorder %s18, 1
      %p139 = por %p137, %p138
      %p140 = scmp.ne.s32.totalorder %s129, %s130
      %p141 = scmp.eq.s32.totalorder %s18, 0
      %p142 = por %p140, %p141
      %p143 = scmp.ne.s32.totalorder %s129, %s130
      %p144 = scmp.eq.s32.totalorder %s19, 1
      %p145 = por %p143, %p144
      %p147 = scmp.ne.s32.totalorder %s130, %s146
      %p148 = scmp.eq.s32.totalorder %s19, 0
      %p149 = por %p147, %p148
      %p150 = scmp.le.s32.totalorder 1, %s13
      %p151 = scmp.lt.s32.totalorder %s13, 3
      %p152 = pnand %p150, %p151
      %p153 = pneg %p152
      // Predicated region
      $region9: #{rbm_forward.1} parent=5 // pred_check
        _
      $region10: #{rbm_forward.1} parent=5 // pred_check_branch
        %155 = sbr.rel (%p152) target = $region12
      $region11: #{rbm_forward.1} parent=5 // pred_region
        %s156 = ssub.s32 %s13, 1
        // Predicated region
        $region13: #{rbm_forward.1} parent=11 // pred_check
          %p157 = pneg %p60
        $region14: #{rbm_forward.1} parent=11 // pred_check_branch
          %159 = sbr.rel (%p157) target = $region16
        $region15: #{rbm_forward.1} parent=11 // pred_region
          %s161 = ssub.s32 128, 128
          %162 = vsyncadd [#allocation4], %s161
          %s163 = sadd.s32 %s25, %s23
          %s164 = smul.addr %s163, 128
          %s165 = scalar_lea.hbm %s0, %s164
          %s167 = sshll.u32 [#allocation3], 4
          %s168 = int_to_ptr.vmem [resolvable:$true] %s167
          %170 = dma.hbm_to_vmem [thread:$0]  %s165, 128, %s168, [#allocation4]
        $region16: #{rbm_forward.1} parent=11 // pred_fallthru
          _
      $region12: #{rbm_forward.1} parent=5 // pred_fallthru
        _
      %p171 = scmp.lt.s32.totalorder %s13, 2
      // Predicated region
      $region17: #{rbm_forward.1} parent=5 // pred_check
        %p172 = pneg %p171
      $region18: #{rbm_forward.1} parent=5 // pred_check_branch
        %174 = sbr.rel (%p172) target = $region20
      $region19: #{rbm_forward.1} parent=5 // pred_region
        // Predicated region
        $region21: #{rbm_forward.1} parent=19 // pred_check
          %p175 = pneg %p82
        $region22: #{rbm_forward.1} parent=19 // pred_check_branch
          %177 = sbr.rel (%p175) target = $region24
        $region23: #{rbm_forward.1} parent=19 // pred_region
          %s178 = sand.u32 %s72, 1
          %s179 = scalar_lea.sflag [#allocation6], %s178
          %s180 = sand.u32 %s72, 1
          %s181 = smul.addr %s180, 64
          %s182 = scalar_lea.vmem [#allocation5], %s181
          %s183 = smul.u32 8, %s22
          %s185 = ssub.s32 1024, 1024
          %186 = vsyncadd %s179, %s185
          %s187 = smul.addr %s183, 2
          %s188 = sadd.s32 %s21, %s187
          %s189 = smul.addr %s188, 128
          %s190 = scalar_lea.hbm %s1, %s189
          %s191 = sshll.u32 %s182, 4
          %s192 = int_to_ptr.vmem [resolvable:$true] %s191
          %197 = dma.hbm_to_vmem [thread:$0]  %s190, 1024, %s192, %s179, 256, 128, 8
        $region24: #{rbm_forward.1} parent=19 // pred_fallthru
          _
        // Predicated region
        $region25: #{rbm_forward.1} parent=19 // pred_check
          %p198 = pneg %p108
        $region26: #{rbm_forward.1} parent=19 // pred_check_branch
          %200 = sbr.rel (%p198) target = $region28
        $region27: #{rbm_forward.1} parent=19 // pred_region
          %p201 = scmp.lt.s32.totalorder %s21, 1
          %s202 = scalar_select %p201, %s21, 1
          %s203 = scalar_lea.vmem %s2, %s202
        $region28: #{rbm_forward.1} parent=19 // pred_fallthru
          _
      $region20: #{rbm_forward.1} parent=5 // pred_fallthru
        _
      %p204 = scmp.le.s32.totalorder 1, %s13
      %p205 = scmp.lt.s32.totalorder %s13, 3
      %p206 = pnand %p204, %p205
      %p207 = pneg %p206
      // Predicated region
      $region29: #{rbm_forward.1} parent=5 // pred_check
        _
      $region30: #{rbm_forward.1} parent=5 // pred_check_branch
        %209 = sbr.rel (%p206) target = $region32
      $region31: #{rbm_forward.1} parent=5 // pred_region
        %s210 = ssub.s32 %s13, 1
        // Predicated region
        $region33: #{rbm_forward.1} parent=31 // pred_check
          %p211 = pneg %p60
        $region34: #{rbm_forward.1} parent=31 // pred_check_branch
          %213 = sbr.rel (%p211) target = $region36
        $region35: #{rbm_forward.1} parent=31 // pred_region
          %214 = dma.done [#allocation4], 128
        $region36: #{rbm_forward.1} parent=31 // pred_fallthru
          _
        %s215 = sand.u32 %s75, 1
        %s216 = scalar_lea.sflag [#allocation6], %s215
        %s217 = sand.u32 %s75, 1
        %s218 = smul.addr %s217, 64
        %s219 = scalar_lea.vmem [#allocation5], %s218
        // Predicated region
        $region37: #{rbm_forward.1} parent=31 // pred_check
          %p220 = pneg %p88
        $region38: #{rbm_forward.1} parent=31 // pred_check_branch
          %222 = sbr.rel (%p220) target = $region40
        $region39: #{rbm_forward.1} parent=31 // pred_region
          %223 = dma.done %s216, 1024
        $region40: #{rbm_forward.1} parent=31 // pred_fallthru
          _
        %p224 = pneg %p60
        %p225 = pneg %p57
        %s226 = sand.u32 %s75, 1
        %s227 = scalar_lea.sflag [#allocation6], %s226
        %s228 = sand.u32 %s75, 1
        %s229 = smul.addr %s228, 64
        %s230 = scalar_lea.vmem [#allocation5], %s229
        %p231 = pneg %p88
        %p232 = pneg %p85
        %p233 = scmp.lt.s32.totalorder %s24, 1
        %s234 = scalar_select %p233, %s24, 1
        %s235 = scalar_lea.vmem %s2, %s234
        %p236 = pneg %p114
        %p237 = pneg %p111
        %p238 = pneg %p142
        %p239 = pneg %p139
        %p240 = scmp.lt.s32.totalorder %s23, 0
        %s241 = scalar_select %p240, %s23, 0
        %p242 = scmp.lt.s32.totalorder %s24, 1
        %s243 = scalar_select %p242, %s24, 1
        %s244 = smul.addr %s241, 2
        %s245 = sadd.s32 %s243, %s244
        %s246 = smul.addr %s245, 8
        %s247 = scalar_lea.vmem %s3, %s246
        %s248 = smul.u32 8, %s25
        %p249 = scmp.lt.s32.totalorder %s24, 1
        %s250 = scalar_select %p249, %s24, 1
        %s251 = scalar_lea.vmem %s2, %s250
        %p252 = scmp.lt.s32.totalorder %s23, 0
        %s253 = scalar_select %p252, %s23, 0
        %p254 = scmp.lt.s32.totalorder %s24, 1
        %s255 = scalar_select %p254, %s24, 1
        %s256 = smul.addr %s253, 2
        %s257 = sadd.s32 %s255, %s256
        %s258 = smul.addr %s257, 8
        %s259 = scalar_lea.vmem %s3, %s258
        %v260 = vld [vmem:[#allocation3] sm:$0xff]
        %v261 = vld [vmem:[%s219] sm:$0xff]
        %v262 = vld [vmem:[%s219 + $0x8] sm:$0xff]
        %v263 = vld [vmem:[%s219 + $0x10] sm:$0xff]
        %v264 = vld [vmem:[%s219 + $0x18] sm:$0xff]
        %v265 = vld [vmem:[%s219 + $0x20] sm:$0xff]
        %v266 = vld [vmem:[%s219 + $0x28] sm:$0xff]
        %v267 = vld [vmem:[%s219 + $0x30] sm:$0xff]
        %v268 = vld [vmem:[%s219 + $0x38] sm:$0xff]
        %vm269 = vcmask 523264
        %v271 = vsel %vm269, %v260, 0
        %273 = vmatprep.subr.mxu0 0.0
        %274 = vmatpush1.msra.mxu0 %v261
        %275 = vmatprep.subr.mxu0 0.0
        %276 = vmatpush1.msra.mxu0 %v262
        %277 = vmatprep.subr.mxu0 0.0
        %278 = vmatpush1.msra.mxu0 %v263
        %279 = vmatprep.subr.mxu0 0.0
        %280 = vmatpush1.msra.mxu0 %v264
        %281 = vmatprep.subr.mxu0 0.0
        %282 = vmatpush1.msra.mxu0 %v265
        %283 = vmatprep.subr.mxu0 0.0
        %284 = vmatpush1.msra.mxu0 %v266
        %285 = vmatprep.subr.mxu0 0.0
        %286 = vmatpush1.msra.mxu0 %v267
        %287 = vmatprep.subr.mxu0 0.0
        %288 = vmatpush1.msra.mxu0 %v268
        %289 = vmatprep.subr.mxu0 0.0
        %290 = vmatpush1.msra.mxu0 0.0
        %291 = vmatprep.subr.mxu0 0.0
        %292 = vmatpush1.msra.mxu0 0.0
        %293 = vmatprep.subr.mxu0 0.0
        %294 = vmatpush1.msra.mxu0 0.0
        %295 = vmatprep.subr.mxu0 0.0
        %296 = vmatpush1.msra.mxu0 0.0
        %297 = vmatprep.subr.mxu0 0.0
        %298 = vmatpush1.msra.mxu0 0.0
        %299 = vmatprep.subr.mxu0 0.0
        %300 = vmatpush1.msra.mxu0 0.0
        %301 = vmatprep.subr.mxu0 0.0
        %302 = vmatpush1.msra.mxu0 0.0
        %303 = vmatprep.subr.mxu0 0.0
        %304 = vmatpush1.msra.mxu0 0.0
        %305 = vmatprep.subr.mxu0 0.0
        %306 = vmatpush1.msra.mxu0 0.0
        %307 = vmatprep.subr.mxu0 0.0
        %308 = vmatpush1.msra.mxu0 0.0
        %309 = vmatprep.subr.mxu0 0.0
        %310 = vmatpush1.msra.mxu0 0.0
        %311 = vmatprep.subr.mxu0 0.0
        %312 = vmatpush1.msra.mxu0 0.0
        %313 = vmatprep.subr.mxu0 0.0
        %314 = vmatpush1.msra.mxu0 0.0
        %315 = vmatprep.subr.mxu0 0.0
        %316 = vmatpush1.msra.mxu0 0.0
        %317 = vmatprep.subr.mxu0 0.0
        %318 = vmatpush1.msra.mxu0 0.0
        %319 = vmatprep.subr.mxu0 0.0
        %320 = vmatpush1.msra.mxu0 0.0
        %321 = vmatprep.subr.mxu0 0.0
        %322 = vmatpush1.msra.mxu0 0.0
        %323 = vmatprep.subr.mxu0 0.0
        %324 = vmatpush1.msra.mxu0 0.0
        %325 = vmatprep.subr.mxu0 0.0
        %326 = vmatpush1.msra.mxu0 0.0
        %327 = vmatprep.subr.mxu0 0.0
        %328 = vmatpush1.msra.mxu0 0.0
        %329 = vmatprep.subr.mxu0 0.0
        %330 = vmatpush1.msra.mxu0 0.0
        %331 = vmatprep.subr.mxu0 0.0
        %332 = vmatpush1.msra.mxu0 0.0
        %333 = vmatprep.subr.mxu0 0.0
        %334 = vmatpush1.msra.mxu0 0.0
        %335 = vmatprep.subr.mxu0 0.0
        %336 = vmatpush1.msra.mxu0 0.0
        %337 = vmatprep.mubr.f32.mxu0 0.0
        %338 = vmatmul.mubr.f32.gmra.mrb[0].mxu0 %v271
        %v339 = vpop.f32.mrb[0].mxu0
        %v340 = vadd.f32 0.0, %v339
        %v341 = vpop.f32.mrb[0].mxu0
        %342 = vdwg.mxu0
        %p343 = scmp.eq.s32.totalorder %s25, 0
        // Predicated region
        $region41: #{rbm_forward.1} parent=31 // pred_check
          %p344 = pneg %p343
        $region42: #{rbm_forward.1} parent=31 // pred_check_branch
          %346 = sbr.rel (%p344) target = $region44
        $region43: #{rbm_forward.1} parent=31 // pred_region
          %347 = vst [vmem:[#allocation2] sm:$0xff] %v340
        $region44: #{rbm_forward.1} parent=31 // pred_fallthru
          _
        %p348 = scmp.gt.s32.totalorder %s25, 0
        // Predicated region
        $region45: #{rbm_forward.1} parent=31 // pred_check
          %p349 = pneg %p348
        $region46: #{rbm_forward.1} parent=31 // pred_check_branch
          %351 = sbr.rel (%p349) target = $region48
        $region47: #{rbm_forward.1} parent=31 // pred_region
          %v352 = vld [vmem:[#allocation2] sm:$0xff]
          %v353 = vadd.f32 %v352, %v340
          %354 = vst [vmem:[#allocation2] sm:$0xff] %v353
        $region48: #{rbm_forward.1} parent=31 // pred_fallthru
          _
        // Predicated region
        $region49: #{rbm_forward.1} parent=31 // pred_check
          %p355 = pneg %p343
        $region50: #{rbm_forward.1} parent=31 // pred_check_branch
          %357 = sbr.rel (%p355) target = $region52
        $region51: #{rbm_forward.1} parent=31 // pred_region
          %v358 = vld [vmem:[#allocation2] sm:$0xff]
          %v359 = vld [vmem:[%s251] sm:$0x1]
          %v361 = vlaneseq
          %v362 = vshrl.u32 %v361, 7
          %v363 = vsub.s32 0, %v362
          %v364 = vrot.slane %v359, %v363
          %v366 = vadd.f32 %v358, %v364
          %v367 = vmul.f32 %v366, 0.5
          %v368 = vtanh.pop %v367
          %v369 = vmul.f32 %v368, 0.5
          %v370 = vadd.f32 %v369, 0.5
          %371 = vst [vmem:[%s259] sm:$0xff] %v370
        $region52: #{rbm_forward.1} parent=31 // pred_fallthru
          _
        %p372 = scmp.lt.s32.totalorder %s23, 0
        %s373 = scalar_select %p372, %s23, 0
        %p374 = scmp.lt.s32.totalorder %s24, 1
        %s375 = scalar_select %p374, %s24, 1
        %s376 = smul.addr %s373, 2
        %s377 = sadd.s32 %s375, %s376
        %s378 = smul.addr %s377, 8
        %s379 = scalar_lea.vmem %s3, %s378
        // Predicated region
        $region53: #{rbm_forward.1} parent=31 // pred_check
          %p380 = pneg %p139
        $region54: #{rbm_forward.1} parent=31 // pred_check_branch
          %382 = sbr.rel (%p380) target = $region56
        $region55: #{rbm_forward.1} parent=31 // pred_region
          _
        $region56: #{rbm_forward.1} parent=31 // pred_fallthru
          _
      $region32: #{rbm_forward.1} parent=5 // pred_fallthru
        _
      %p383 = scmp.le.s32.totalorder 2, %s13
      // Predicated region
      $region57: #{rbm_forward.1} parent=5 // pred_check
        %p384 = pneg %p383
      $region58: #{rbm_forward.1} parent=5 // pred_check_branch
        %386 = sbr.rel (%p384) target = $region60
      $region59: #{rbm_forward.1} parent=5 // pred_region
        %s387 = ssub.s32 %s13, 2
        // Predicated region
        $region61: #{rbm_forward.1} parent=59 // pred_check
          %p388 = pneg %p145
        $region62: #{rbm_forward.1} parent=59 // pred_check_branch
          %390 = sbr.rel (%p388) target = $region64
        $region63: #{rbm_forward.1} parent=59 // pred_region
          %p391 = scmp.lt.s32.totalorder %s26, 0
          %s392 = scalar_select %p391, %s26, 0
          %p393 = scmp.lt.s32.totalorder %s27, 1
          %s394 = scalar_select %p393, %s27, 1
          %s395 = smul.addr %s392, 2
          %s396 = sadd.s32 %s394, %s395
          %s397 = smul.addr %s396, 8
          %s398 = scalar_lea.vmem %s3, %s397
        $region64: #{rbm_forward.1} parent=59 // pred_fallthru
          _
      $region60: #{rbm_forward.1} parent=5 // pred_fallthru
        _
    $region6: #{rbm_forward.1} parent=1 // loop_footer
      %s17 = sadd.s32 1, %s13
    $region7: #{rbm_forward.1} parent=1 // loop_footer_branch
      %12 = sbr.rel target = $region3
    $region8: #{rbm_forward.1} parent=1 // loop_exit
      _
    %399 = vsyncpa [#allocation4], 1
    %s400 = scalar_lea.sflag [#allocation4], 1
    %401 = vsyncpa %s400, 1
    %402 = vsyncpa [#allocation6], 1
    %s403 = scalar_lea.sflag [#allocation6], 1
    %404 = vsyncpa %s403, 1

</llo_original>
